<compile_context>
chip_gen: v7x
topology: tpu7x:2x2x1
jax: 0.10.0
libtpu: 0.0.40
codegen_flags: <defaults>
</compile_context>

<pallas_src>
import math

import jax
import jax.numpy as jnp
from jax.experimental import pallas as pl
from jax.experimental.pallas import tpu as pltpu

_LANE = 128     # lane width (last dim store alignment)
_SUBLANE = 8    # f32 sublane multiple for the second-to-last block dim


def _round_up(n: int, m: int) -> int:
    return ((n + m - 1) // m) * m


def _fused_mlp_kernel(x_ref, *refs):
    """All Linear (+ Sigmoid) layers fused; activations stay on-chip.

    refs = (w0, b0, w1, b1, ..., wN, bN, out_ref).
    """
    o_ref = refs[-1]
    wb = refs[:-1]
    n_layers = len(wb) // 2

    h = x_ref[...]                                      # bf16 (tile_b, d_in)
    for li in range(n_layers):
        w_ref = wb[2 * li]
        b_ref = wb[2 * li + 1]
        # MXU matmul in bf16 with f32 accumulation; bias add in f32.
        y = jnp.dot(h, w_ref[...], preferred_element_type=jnp.float32)
        y = y + b_ref[...]                              # (1, out) f32 bias
        if li < n_layers - 1:
            # sigmoid(y) = 0.5*tanh(0.5*y) + 0.5 : one EUP push per element;
            # the extra mul/add land in VALU slots with slack. Exact (no
            # approx reciprocal), kept in f32 (v5e has no bf16 VPU/EUP path).
            y = 0.5 * jnp.tanh(0.5 * y) + 0.5
            h = y.astype(jnp.bfloat16)                  # bf16 operand for next MXU
        else:
            o_ref[...] = y.astype(o_ref.dtype)          # single lane-dense store


def init_mlp_params(key, input_dim, hidden_dims, output_dim):
    """Parameter init mirroring the PyTorch module.

    Weights: kaiming_uniform_(nonlinearity='relu') -> bound = sqrt(2)*sqrt(3/fan_in).
    Biases:  PyTorch nn.Linear default, uniform(-1/sqrt(fan_in), 1/sqrt(fan_in)).
    Weights stored as (in_dim, out_dim) for row-major x @ w.
    """
    params = []
    dims = [input_dim] + list(hidden_dims) + [output_dim]
    for i in range(len(dims) - 1):
        fan_in, fan_out = dims[i], dims[i + 1]
        key, kw, kb = jax.random.split(key, 3)
        w_bound = math.sqrt(2.0) * math.sqrt(3.0 / fan_in)
        w = jax.random.uniform(kw, (fan_in, fan_out), jnp.float32,
                               minval=-w_bound, maxval=w_bound)
        b_bound = 1.0 / math.sqrt(fan_in)
        b = jax.random.uniform(kb, (fan_out,), jnp.float32,
                               minval=-b_bound, maxval=b_bound)
        params.append((w, b))
    return params


def prepare_params(params):
    """One-time conversion of (w, b) pairs into kernel layouts.

    * bf16 (in, out) weights, f32 (1, out) biases.
    * Hidden layer dims stay UNPADDED (no wasted weight DMA / EUP work).
    * Only the FINAL layer's output dim is padded to a 128-lane multiple so
      the logits store is lane-dense.
    Call once at init time, NOT per forward call (avoids an extra HBM
    write+read of every weight per step).
    """
    prepared = []
    n_layers = len(params)
    for li, (w, b) in enumerate(params):
        out_dim = w.shape[1]
        out_p = _round_up(out_dim, _LANE) if li == n_layers - 1 else out_dim
        w_bf = w.astype(jnp.bfloat16)
        b_f32 = b.astype(jnp.float32)
        if out_p == out_dim:
            w_p = w_bf
            b_p = b_f32.reshape(1, out_dim)
        else:
            w_p = jnp.zeros((w.shape[0], out_p), jnp.bfloat16
                            ).at[:, :out_dim].set(w_bf)
            b_p = jnp.zeros((1, out_p), jnp.float32).at[0, :out_dim].set(b_f32)
        prepared.append((w_p, b_p))
    return prepared


def _choose_batch_tiling(B: int):
    """Pick (padded_batch, batch_tile).

    Fat tiles (<=512 rows) amortize the ~0.35us/grid-step overhead; tiles are
    exact divisors of the padded batch when possible (no wasted full padding
    tile), and larger batches prefer >= 2 grid steps so both v7x TensorCores
    get work under the 'parallel' batch axis.
    """
    b_pad = _round_up(max(B, _SUBLANE), _SUBLANE)
    if b_pad <= 128:
        return b_pad, b_pad
    for cand in (512, 384, 256, 128):
        if b_pad % cand == 0 and b_pad // cand >= 2:
            return b_pad, cand
    for cand in (512, 384, 256, 128):
        if b_pad % cand == 0:
            return b_pad, cand
    # Awkward batch: round up to the multiple-of-128 tiling wasting the fewest
    # padded rows.
    return min((_round_up(b_pad, c), c) for c in (128, 256, 384, 512))


def mlp_forward(x_nchw, prepared_params, output_dim):
    """Flatten (B,C,H,W) -> (B, C*H*W), run the fused MLP kernel, un-pad."""
    B = x_nchw.shape[0]
    # Flatten + cast in one pass (no intermediate f32 copy, no column padding).
    x = x_nchw.reshape(B, -1).astype(jnp.bfloat16)
    d_in = x.shape[1]
    out_pad = prepared_params[-1][0].shape[1]

    b_pad, tile_b = _choose_batch_tiling(B)
    if b_pad != B:
        x = jnp.pad(x, ((0, b_pad - B), (0, 0)))
    grid = (b_pad // tile_b,)

    # x is pipelined over the batch grid; weights/biases are grid-invariant so
    # they live as a single whole-array VMEM copy (no double buffering).
    operands = [x]
    in_specs = [pl.BlockSpec((tile_b, d_in), lambda i: (i, 0))]
    const_spec = pl.BlockSpec(memory_space=pltpu.MemorySpace.VMEM)
    for (w_p, b_p) in prepared_params:
        operands += [w_p, b_p]
        in_specs += [const_spec, const_spec]

    # Resident VMEM: one copy of every weight/bias + double-buffered x / out
    # tiles. Request exactly that (plus headroom), capped at v7x's 64 MiB.
    param_bytes = sum(int(a.size) * a.dtype.itemsize
                      for (w_p, b_p) in prepared_params for a in (w_p, b_p))
    resident = (param_bytes
                + 2 * tile_b * d_in * 2        # x tile, bf16, double buffered
                + 2 * tile_b * out_pad * 4)    # out tile, f32, double buffered
    vmem_limit = min(max(int(1.25 * resident) + (8 << 20), 32 << 20), 64 << 20)

    # Advisory cost estimate on the dims actually computed.
    dims = [d_in] + [w.shape[1] for (w, _) in prepared_params]
    n_layers = len(prepared_params)
    flops = sum(2 * b_pad * dims[i] * dims[i + 1] for i in range(n_layers))
    transcendentals = b_pad * sum(dims[1:-1])   # one tanh per hidden element
    bytes_accessed = int(x.size) * 2 + param_bytes + b_pad * out_pad * 4

    out = pl.pallas_call(
        _fused_mlp_kernel,
        out_shape=jax.ShapeDtypeStruct((b_pad, out_pad), jnp.float32),
        grid_spec=pltpu.PrefetchScalarGridSpec(
            num_scalar_prefetch=0,
            grid=grid,
            in_specs=in_specs,
            out_specs=pl.BlockSpec((tile_b, out_pad), lambda i: (i, 0)),
        ),
        compiler_params=pltpu.CompilerParams(
            dimension_semantics=("parallel",),
            vmem_limit_bytes=vmem_limit),
        cost_estimate=pl.CostEstimate(
            flops=flops,
            transcendentals=transcendentals,
            bytes_accessed=bytes_accessed),
    )(*operands)

    # Slice padded batch rows / padded logit lanes back to the real logits.
    return out[:B, :output_dim]


if __name__ == "__main__":
    key = jax.random.PRNGKey(0)
    kx, kp = jax.random.split(key)

    # Small shapes consistent with image-classifier usage of the module.
    batch, channels, spatial = 2, 4, 16
    input_dim = channels * spatial * spatial   # 1024
    hidden_dims = [32, 32]
    output_dim = 10

    x = jax.random.normal(kx, (batch, channels, spatial, spatial), jnp.float32)
    params = init_mlp_params(kp, input_dim, hidden_dims, output_dim)
    prepared = prepare_params(params)          # one-time layout prep

    logits = mlp_forward(x, prepared, output_dim)
    jax.block_until_ready(logits)

    assert logits.shape == (batch, output_dim)
    assert logits.dtype == jnp.float32
    assert bool(jnp.all(jnp.isfinite(logits)))
    print("KERNEL_OK")
</pallas_src>

<mosaic_0001>
module attributes {stable_mosaic.version = 11 : i64} {
  func.func @_fused_mlp_kernel(%arg0: i32, %arg1: memref<8x1024xbf16, #tpu.memory_space<vmem>>, %arg2: memref<1024x32xbf16, #tpu.memory_space<vmem>>, %arg3: memref<1x32xf32, #tpu.memory_space<vmem>>, %arg4: memref<32x32xbf16, #tpu.memory_space<vmem>>, %arg5: memref<1x32xf32, #tpu.memory_space<vmem>>, %arg6: memref<32x128xbf16, #tpu.memory_space<vmem>>, %arg7: memref<1x128xf32, #tpu.memory_space<vmem>>, %arg8: memref<8x128xf32, #tpu.memory_space<vmem>>) attributes {dimension_semantics = [#tpu.dimension_semantics<parallel>], iteration_bounds = array<i64: 1>, scalar_prefetch = 0 : i64, scratch_operands = 0 : i64, tpu.core_type = #tpu.core_type<tc>, window_params = [{transform_indices = @transform_0, window_bounds = array<i64: 8, 1024>}, {pipeline_mode = #tpu.pipeline_mode<synchronous>, transform_indices = @transform_1, window_bounds = array<i64: 1024, 32>}, {pipeline_mode = #tpu.pipeline_mode<synchronous>, transform_indices = @transform_2, window_bounds = array<i64: 1, 32>}, {pipeline_mode = #tpu.pipeline_mode<synchronous>, transform_indices = @transform_3, window_bounds = array<i64: 32, 32>}, {pipeline_mode = #tpu.pipeline_mode<synchronous>, transform_indices = @transform_4, window_bounds = array<i64: 1, 32>}, {pipeline_mode = #tpu.pipeline_mode<synchronous>, transform_indices = @transform_5, window_bounds = array<i64: 32, 128>}, {pipeline_mode = #tpu.pipeline_mode<synchronous>, transform_indices = @transform_6, window_bounds = array<i64: 1, 128>}, {transform_indices = @transform_7, window_bounds = array<i64: 8, 128>}]} {
    %c0 = arith.constant 0 : index
    %c0_0 = arith.constant 0 : index
    %0 = vector.load %arg1[%c0, %c0_0] : memref<8x1024xbf16, #tpu.memory_space<vmem>>, vector<8x1024xbf16>
    %c0_1 = arith.constant 0 : index
    %c0_2 = arith.constant 0 : index
    %1 = vector.load %arg2[%c0_1, %c0_2] : memref<1024x32xbf16, #tpu.memory_space<vmem>>, vector<1024x32xbf16>
    %cst = arith.constant dense<0.000000e+00> : vector<8x32xf32>
    %2 = tpu.matmul %0, %1, %cst {dimension_numbers = #tpu.dot_dimension_numbers<[1], [0], [0], [1], [0, 0, 1, 1], [], []>} : vector<8x1024xbf16>, vector<1024x32xbf16>, vector<8x32xf32> -> vector<8x32xf32>
    %c0_3 = arith.constant 0 : index
    %c0_4 = arith.constant 0 : index
    %3 = vector.load %arg3[%c0_3, %c0_4] : memref<1x32xf32, #tpu.memory_space<vmem>>, vector<1x32xf32>
    %4 = vector.broadcast %3 : vector<1x32xf32> to vector<8x32xf32>
    %5 = arith.addf %2, %4 : vector<8x32xf32>
    %cst_5 = arith.constant 5.000000e-01 : f32
    %6 = vector.broadcast %cst_5 : f32 to vector<8x32xf32>
    %7 = arith.mulf %6, %5 : vector<8x32xf32>
    %8 = math.tanh %7 : vector<8x32xf32>
    %cst_6 = arith.constant 5.000000e-01 : f32
    %9 = vector.broadcast %cst_6 : f32 to vector<8x32xf32>
    %10 = arith.mulf %9, %8 : vector<8x32xf32>
    %cst_7 = arith.constant 5.000000e-01 : f32
    %11 = vector.broadcast %cst_7 : f32 to vector<8x32xf32>
    %12 = arith.addf %10, %11 : vector<8x32xf32>
    %13 = arith.truncf %12 : vector<8x32xf32> to vector<8x32xbf16>
    %c0_8 = arith.constant 0 : index
    %c0_9 = arith.constant 0 : index
    %14 = vector.load %arg4[%c0_8, %c0_9] : memref<32x32xbf16, #tpu.memory_space<vmem>>, vector<32x32xbf16>
    %cst_10 = arith.constant dense<0.000000e+00> : vector<8x32xf32>
    %15 = tpu.matmul %13, %14, %cst_10 {dimension_numbers = #tpu.dot_dimension_numbers<[1], [0], [0], [1], [0, 0, 1, 1], [], []>} : vector<8x32xbf16>, vector<32x32xbf16>, vector<8x32xf32> -> vector<8x32xf32>
    %c0_11 = arith.constant 0 : index
    %c0_12 = arith.constant 0 : index
    %16 = vector.load %arg5[%c0_11, %c0_12] : memref<1x32xf32, #tpu.memory_space<vmem>>, vector<1x32xf32>
    %17 = vector.broadcast %16 : vector<1x32xf32> to vector<8x32xf32>
    %18 = arith.addf %15, %17 : vector<8x32xf32>
    %cst_13 = arith.constant 5.000000e-01 : f32
    %19 = vector.broadcast %cst_13 : f32 to vector<8x32xf32>
    %20 = arith.mulf %19, %18 : vector<8x32xf32>
    %21 = math.tanh %20 : vector<8x32xf32>
    %cst_14 = arith.constant 5.000000e-01 : f32
    %22 = vector.broadcast %cst_14 : f32 to vector<8x32xf32>
    %23 = arith.mulf %22, %21 : vector<8x32xf32>
    %cst_15 = arith.constant 5.000000e-01 : f32
    %24 = vector.broadcast %cst_15 : f32 to vector<8x32xf32>
    %25 = arith.addf %23, %24 : vector<8x32xf32>
    %26 = arith.truncf %25 : vector<8x32xf32> to vector<8x32xbf16>
    %c0_16 = arith.constant 0 : index
    %c0_17 = arith.constant 0 : index
    %27 = vector.load %arg6[%c0_16, %c0_17] : memref<32x128xbf16, #tpu.memory_space<vmem>>, vector<32x128xbf16>
    %cst_18 = arith.constant dense<0.000000e+00> : vector<8x128xf32>
    %28 = tpu.matmul %26, %27, %cst_18 {dimension_numbers = #tpu.dot_dimension_numbers<[1], [0], [0], [1], [0, 0, 1, 1], [], []>} : vector<8x32xbf16>, vector<32x128xbf16>, vector<8x128xf32> -> vector<8x128xf32>
    %c0_19 = arith.constant 0 : index
    %c0_20 = arith.constant 0 : index
    %29 = vector.load %arg7[%c0_19, %c0_20] : memref<1x128xf32, #tpu.memory_space<vmem>>, vector<1x128xf32>
    %30 = vector.broadcast %29 : vector<1x128xf32> to vector<8x128xf32>
    %31 = arith.addf %28, %30 : vector<8x128xf32>
    %c0_21 = arith.constant 0 : index
    %c0_22 = arith.constant 0 : index
    %32 = vector.load %arg8[%c0_21, %c0_22] : memref<8x128xf32, #tpu.memory_space<vmem>>, vector<8x128xf32>
    tpu.vector_store %arg8[%c0_21, %c0_22], %31 {strides = array<i32>} : memref<8x128xf32, #tpu.memory_space<vmem>>, vector<8x128xf32>,
    return
  }
  func.func @transform_0(%arg0: i32) -> (i32, i32) {
    %c0_i32 = arith.constant 0 : i32
    %c0_i32_0 = arith.constant 0 : i32
    return %arg0, %c0_i32 : i32, i32
  }
  func.func @transform_1(%arg0: i32) -> (i32, i32) {
    %c0_i32 = arith.constant 0 : i32
    %c0_i32_0 = arith.constant 0 : i32
    %c0_i32_1 = arith.constant 0 : i32
    return %c0_i32, %c0_i32_0 : i32, i32
  }
  func.func @transform_2(%arg0: i32) -> (i32, i32) {
    %c0_i32 = arith.constant 0 : i32
    %c0_i32_0 = arith.constant 0 : i32
    %c0_i32_1 = arith.constant 0 : i32
    return %c0_i32, %c0_i32_0 : i32, i32
  }
  func.func @transform_3(%arg0: i32) -> (i32, i32) {
    %c0_i32 = arith.constant 0 : i32
    %c0_i32_0 = arith.constant 0 : i32
    %c0_i32_1 = arith.constant 0 : i32
    return %c0_i32, %c0_i32_0 : i32, i32
  }
  func.func @transform_4(%arg0: i32) -> (i32, i32) {
    %c0_i32 = arith.constant 0 : i32
    %c0_i32_0 = arith.constant 0 : i32
    %c0_i32_1 = arith.constant 0 : i32
    return %c0_i32, %c0_i32_0 : i32, i32
  }
  func.func @transform_5(%arg0: i32) -> (i32, i32) {
    %c0_i32 = arith.constant 0 : i32
    %c0_i32_0 = arith.constant 0 : i32
    %c0_i32_1 = arith.constant 0 : i32
    return %c0_i32, %c0_i32_0 : i32, i32
  }
  func.func @transform_6(%arg0: i32) -> (i32, i32) {
    %c0_i32 = arith.constant 0 : i32
    %c0_i32_0 = arith.constant 0 : i32
    %c0_i32_1 = arith.constant 0 : i32
    return %c0_i32, %c0_i32_0 : i32, i32
  }
  func.func @transform_7(%arg0: i32) -> (i32, i32) {
    %c0_i32 = arith.constant 0 : i32
    %c0_i32_0 = arith.constant 0 : i32
    return %arg0, %c0_i32 : i32, i32
  }
}

</mosaic_0001>

<llo_original>
// kernel: tpu_custom_call.1
$region0: #{tpu_custom_call.1}
  #allocation0 [shape = 'u32[]', space=smem, size = 0x4, offset = 0x4, fixed_abs, tag = 'smem constant byte address 0x4 - core index']
  #allocation1 [shape = 'u32[144,128]{1,0:T(1,128)}', space=vmem, size = 0x12000, scoped, tag = 'internal scratch']
  %s0 = inlined_call_operand.vmem [shape: bf16[8,1024], index: 0, kind: input, shape index: {}]
  %s1 = inlined_call_operand.vmem [shape: bf16[1024,32], index: 1, kind: input, shape index: {}]
  %s2 = inlined_call_operand.vmem [shape: f32[1,32], index: 2, kind: input, shape index: {}]
  %s3 = inlined_call_operand.vmem [shape: bf16[32,32], index: 3, kind: input, shape index: {}]
  %s4 = inlined_call_operand.vmem [shape: f32[1,32], index: 4, kind: input, shape index: {}]
  %s5 = inlined_call_operand.vmem [shape: bf16[32,128], index: 5, kind: input, shape index: {}]
  %s6 = inlined_call_operand.vmem [shape: f32[1,128], index: 6, kind: input, shape index: {}]
  %s7 = inlined_call_operand.hbm [shape: f32[8,128], index: 7, kind: output, shape index: {}]
  %s8 = sld [smem:[#allocation0]]
  $region38: #{tpu_custom_call.1} parent=0
    _
  %s10 = ssub.s32 1, %s8
  %s11 = scalar_select 0, %s10, %s8
  $region1: #{tpu_custom_call.1} parent=0
    #allocation2 [shape = 'u8[4096]{0}', space=vmem, size = 0x1000, scoped, tag = 'output window, operand 0, single buffered']
    #allocation3 [shape = 's32[1]{0}', space=sflag, size = 0x4, scoped, tag = 'scoped memory for tpu_custom_call.1']
    %12 = vsyncpa [#allocation3], 0
    // Predicated region
    $region2: #{tpu_custom_call.1} parent=1 // pred_check
      _
    $region3: #{tpu_custom_call.1} parent=1 // pred_check_branch
      %14 = sbr.rel (0) target = $region5
    $region4: #{tpu_custom_call.1} parent=1 // pred_region
      _
    $region5: #{tpu_custom_call.1} parent=1 // pred_fallthru
      _
    // Predicated region
    $region6: #{tpu_custom_call.1} parent=1 // pred_check
      _
    $region7: #{tpu_custom_call.1} parent=1 // pred_check_branch
      %16 = sbr.rel (0) target = $region9
    $region8: #{tpu_custom_call.1} parent=1 // pred_region
      _
    $region9: #{tpu_custom_call.1} parent=1 // pred_fallthru
      _
    // Predicated region
    $region10: #{tpu_custom_call.1} parent=1 // pred_check
      _
    $region11: #{tpu_custom_call.1} parent=1 // pred_check_branch
      %18 = sbr.rel (0) target = $region13
    $region12: #{tpu_custom_call.1} parent=1 // pred_region
      _
    $region13: #{tpu_custom_call.1} parent=1 // pred_fallthru
      _
    // Predicated region
    $region14: #{tpu_custom_call.1} parent=1 // pred_check
      _
    $region15: #{tpu_custom_call.1} parent=1 // pred_check_branch
      %20 = sbr.rel (0) target = $region17
    $region16: #{tpu_custom_call.1} parent=1 // pred_region
      _
    $region17: #{tpu_custom_call.1} parent=1 // pred_fallthru
      _
    // Predicated region
    $region18: #{tpu_custom_call.1} parent=1 // pred_check
      _
    $region19: #{tpu_custom_call.1} parent=1 // pred_check_branch
      %22 = sbr.rel (0) target = $region21
    $region20: #{tpu_custom_call.1} parent=1 // pred_region
      _
    $region21: #{tpu_custom_call.1} parent=1 // pred_fallthru
      _
    // Predicated region
    $region22: #{tpu_custom_call.1} parent=1 // pred_check
      _
    $region23: #{tpu_custom_call.1} parent=1 // pred_check_branch
      %24 = sbr.rel (0) target = $region25
    $region24: #{tpu_custom_call.1} parent=1 // pred_region
      _
    $region25: #{tpu_custom_call.1} parent=1 // pred_fallthru
      _
    // Predicated region
    $region26: #{tpu_custom_call.1} parent=1 // pred_check
      _
    $region27: #{tpu_custom_call.1} parent=1 // pred_check_branch
      %26 = sbr.rel (0) target = $region29
    $region28: #{tpu_custom_call.1} parent=1 // pred_region
      _
    $region29: #{tpu_custom_call.1} parent=1 // pred_fallthru
      _
    %v28 = vld [vmem:[%s0] sm:$0xff]
    %v29 = vld [vmem:[%s0 + $0x8] sm:$0xff]
    %v30 = vld [vmem:[%s0 + $0x10] sm:$0xff]
    %v31 = vld [vmem:[%s0 + $0x18] sm:$0xff]
    %v32 = vld [vmem:[%s1] sm:$0xf]
    %v33 = vld [vmem:[%s1 + $0x4] sm:$0xf]
    %v34 = vld [vmem:[%s1 + $0x8] sm:$0xf]
    %v35 = vld [vmem:[%s1 + $0xc] sm:$0xf]
    %v36 = vld [vmem:[%s1 + $0x10] sm:$0xf]
    %v37 = vld [vmem:[%s1 + $0x14] sm:$0xf]
    %v38 = vld [vmem:[%s1 + $0x18] sm:$0xf]
    %v39 = vld [vmem:[%s1 + $0x1c] sm:$0xf]
    %v40 = vld [vmem:[%s1 + $0x20] sm:$0xf]
    %v41 = vld [vmem:[%s1 + $0x24] sm:$0xf]
    %v42 = vld [vmem:[%s1 + $0x28] sm:$0xf]
    %v43 = vld [vmem:[%s1 + $0x2c] sm:$0xf]
    %v44 = vld [vmem:[%s1 + $0x30] sm:$0xf]
    %v45 = vld [vmem:[%s1 + $0x34] sm:$0xf]
    %v46 = vld [vmem:[%s1 + $0x38] sm:$0xf]
    %v47 = vld [vmem:[%s1 + $0x3c] sm:$0xf]
    %v48 = vld [vmem:[%s1 + $0x40] sm:$0xf]
    %v49 = vld [vmem:[%s1 + $0x44] sm:$0xf]
    %v50 = vld [vmem:[%s1 + $0x48] sm:$0xf]
    %v51 = vld [vmem:[%s1 + $0x4c] sm:$0xf]
    %v52 = vld [vmem:[%s1 + $0x50] sm:$0xf]
    %v53 = vld [vmem:[%s1 + $0x54] sm:$0xf]
    %v54 = vld [vmem:[%s1 + $0x58] sm:$0xf]
    %v55 = vld [vmem:[%s1 + $0x5c] sm:$0xf]
    %v56 = vld [vmem:[%s1 + $0x60] sm:$0xf]
    %v57 = vld [vmem:[%s1 + $0x64] sm:$0xf]
    %v58 = vld [vmem:[%s1 + $0x68] sm:$0xf]
    %v59 = vld [vmem:[%s1 + $0x6c] sm:$0xf]
    %v60 = vld [vmem:[%s1 + $0x70] sm:$0xf]
    %v61 = vld [vmem:[%s1 + $0x74] sm:$0xf]
    %v62 = vld [vmem:[%s1 + $0x78] sm:$0xf]
    %v63 = vld [vmem:[%s1 + $0x7c] sm:$0xf]
    %v64 = vld [vmem:[%s1 + $0x80] sm:$0xf]
    %v65 = vld [vmem:[%s1 + $0x84] sm:$0xf]
    %v66 = vld [vmem:[%s1 + $0x88] sm:$0xf]
    %v67 = vld [vmem:[%s1 + $0x8c] sm:$0xf]
    %v68 = vld [vmem:[%s1 + $0x90] sm:$0xf]
    %v69 = vld [vmem:[%s1 + $0x94] sm:$0xf]
    %v70 = vld [vmem:[%s1 + $0x98] sm:$0xf]
    %v71 = vld [vmem:[%s1 + $0x9c] sm:$0xf]
    %v72 = vld [vmem:[%s1 + $0xa0] sm:$0xf]
    %v73 = vld [vmem:[%s1 + $0xa4] sm:$0xf]
    %v74 = vld [vmem:[%s1 + $0xa8] sm:$0xf]
    %v75 = vld [vmem:[%s1 + $0xac] sm:$0xf]
    %v76 = vld [vmem:[%s1 + $0xb0] sm:$0xf]
    %v77 = vld [vmem:[%s1 + $0xb4] sm:$0xf]
    %v78 = vld [vmem:[%s1 + $0xb8] sm:$0xf]
    %v79 = vld [vmem:[%s1 + $0xbc] sm:$0xf]
    %v80 = vld [vmem:[%s1 + $0xc0] sm:$0xf]
    %v81 = vld [vmem:[%s1 + $0xc4] sm:$0xf]
    %v82 = vld [vmem:[%s1 + $0xc8] sm:$0xf]
    %v83 = vld [vmem:[%s1 + $0xcc] sm:$0xf]
    %v84 = vld [vmem:[%s1 + $0xd0] sm:$0xf]
    %v85 = vld [vmem:[%s1 + $0xd4] sm:$0xf]
    %v86 = vld [vmem:[%s1 + $0xd8] sm:$0xf]
    %v87 = vld [vmem:[%s1 + $0xdc] sm:$0xf]
    %v88 = vld [vmem:[%s1 + $0xe0] sm:$0xf]
    %v89 = vld [vmem:[%s1 + $0xe4] sm:$0xf]
    %v90 = vld [vmem:[%s1 + $0xe8] sm:$0xf]
    %v91 = vld [vmem:[%s1 + $0xec] sm:$0xf]
    %v92 = vld [vmem:[%s1 + $0xf0] sm:$0xf]
    %v93 = vld [vmem:[%s1 + $0xf4] sm:$0xf]
    %v94 = vld [vmem:[%s1 + $0xf8] sm:$0xf]
    %v95 = vld [vmem:[%s1 + $0xfc] sm:$0xf]
    %v96 = vld [vmem:[%s1 + $0x100] sm:$0xf]
    %v97 = vld [vmem:[%s1 + $0x104] sm:$0xf]
    %v98 = vld [vmem:[%s1 + $0x108] sm:$0xf]
    %v99 = vld [vmem:[%s1 + $0x10c] sm:$0xf]
    %v100 = vld [vmem:[%s1 + $0x110] sm:$0xf]
    %v101 = vld [vmem:[%s1 + $0x114] sm:$0xf]
    %v102 = vld [vmem:[%s1 + $0x118] sm:$0xf]
    %v103 = vld [vmem:[%s1 + $0x11c] sm:$0xf]
    %v104 = vld [vmem:[%s1 + $0x120] sm:$0xf]
    %v105 = vld [vmem:[%s1 + $0x124] sm:$0xf]
    %v106 = vld [vmem:[%s1 + $0x128] sm:$0xf]
    %v107 = vld [vmem:[%s1 + $0x12c] sm:$0xf]
    %v108 = vld [vmem:[%s1 + $0x130] sm:$0xf]
    %v109 = vld [vmem:[%s1 + $0x134] sm:$0xf]
    %v110 = vld [vmem:[%s1 + $0x138] sm:$0xf]
    %v111 = vld [vmem:[%s1 + $0x13c] sm:$0xf]
    %v112 = vld [vmem:[%s1 + $0x140] sm:$0xf]
    %v113 = vld [vmem:[%s1 + $0x144] sm:$0xf]
    %v114 = vld [vmem:[%s1 + $0x148] sm:$0xf]
    %v115 = vld [vmem:[%s1 + $0x14c] sm:$0xf]
    %v116 = vld [vmem:[%s1 + $0x150] sm:$0xf]
    %v117 = vld [vmem:[%s1 + $0x154] sm:$0xf]
    %v118 = vld [vmem:[%s1 + $0x158] sm:$0xf]
    %v119 = vld [vmem:[%s1 + $0x15c] sm:$0xf]
    %v120 = vld [vmem:[%s1 + $0x160] sm:$0xf]
    %v121 = vld [vmem:[%s1 + $0x164] sm:$0xf]
    %v122 = vld [vmem:[%s1 + $0x168] sm:$0xf]
    %v123 = vld [vmem:[%s1 + $0x16c] sm:$0xf]
    %v124 = vld [vmem:[%s1 + $0x170] sm:$0xf]
    %v125 = vld [vmem:[%s1 + $0x174] sm:$0xf]
    %v126 = vld [vmem:[%s1 + $0x178] sm:$0xf]
    %v127 = vld [vmem:[%s1 + $0x17c] sm:$0xf]
    %v128 = vld [vmem:[%s1 + $0x180] sm:$0xf]
    %v129 = vld [vmem:[%s1 + $0x184] sm:$0xf]
    %v130 = vld [vmem:[%s1 + $0x188] sm:$0xf]
    %v131 = vld [vmem:[%s1 + $0x18c] sm:$0xf]
    %v132 = vld [vmem:[%s1 + $0x190] sm:$0xf]
    %v133 = vld [vmem:[%s1 + $0x194] sm:$0xf]
    %v134 = vld [vmem:[%s1 + $0x198] sm:$0xf]
    %v135 = vld [vmem:[%s1 + $0x19c] sm:$0xf]
    %v136 = vld [vmem:[%s1 + $0x1a0] sm:$0xf]
    %v137 = vld [vmem:[%s1 + $0x1a4] sm:$0xf]
    %v138 = vld [vmem:[%s1 + $0x1a8] sm:$0xf]
    %v139 = vld [vmem:[%s1 + $0x1ac] sm:$0xf]
    %v140 = vld [vmem:[%s1 + $0x1b0] sm:$0xf]
    %v141 = vld [vmem:[%s1 + $0x1b4] sm:$0xf]
    %v142 = vld [vmem:[%s1 + $0x1b8] sm:$0xf]
    %v143 = vld [vmem:[%s1 + $0x1bc] sm:$0xf]
    %v144 = vld [vmem:[%s1 + $0x1c0] sm:$0xf]
    %v145 = vld [vmem:[%s1 + $0x1c4] sm:$0xf]
    %v146 = vld [vmem:[%s1 + $0x1c8] sm:$0xf]
    %v147 = vld [vmem:[%s1 + $0x1cc] sm:$0xf]
    %v148 = vld [vmem:[%s1 + $0x1d0] sm:$0xf]
    %v149 = vld [vmem:[%s1 + $0x1d4] sm:$0xf]
    %v150 = vld [vmem:[%s1 + $0x1d8] sm:$0xf]
    %v151 = vld [vmem:[%s1 + $0x1dc] sm:$0xf]
    %v152 = vld [vmem:[%s1 + $0x1e0] sm:$0xf]
    %v153 = vld [vmem:[%s1 + $0x1e4] sm:$0xf]
    %v154 = vld [vmem:[%s1 + $0x1e8] sm:$0xf]
    %v155 = vld [vmem:[%s1 + $0x1ec] sm:$0xf]
    %v156 = vld [vmem:[%s1 + $0x1f0] sm:$0xf]
    %v157 = vld [vmem:[%s1 + $0x1f4] sm:$0xf]
    %v158 = vld [vmem:[%s1 + $0x1f8] sm:$0xf]
    %v159 = vld [vmem:[%s1 + $0x1fc] sm:$0xf]
    %v160 = vld [vmem:[%s2] sm:$0x1]
    %v162 = vlaneseq
    %v163 = vshrl.u32 %v162, 7
    %v164 = vsub.s32 0, %v163
    %v165 = vrot.slane %v160, %v164
    %v171 = vunpack.c.l.b16 %v28
    %v172 = vunpack.c.h.b16 %v28
    %v173 = vunpack.c.l.b16 %v29
    %v174 = vunpack.c.h.b16 %v29
    %v175 = vunpack.c.l.b16 %v30
    %v176 = vunpack.c.h.b16 %v30
    %v177 = vunpack.c.l.b16 %v31
    %v178 = vunpack.c.h.b16 %v31
    %v179 = vpack.c.b16 %v171, %v171
    %v180 = vpack.c.b16 %v172, %v172
    %v181 = vpack.c.b16 %v173, %v173
    %v182 = vpack.c.b16 %v174, %v174
    %v183 = vpack.c.b16 %v175, %v175
    %v184 = vpack.c.b16 %v176, %v176
    %v185 = vpack.c.b16 %v177, %v177
    %v186 = vpack.c.b16 %v178, %v178
    %v323 = vunpack.c.l.b16 %v32
    %v324 = vunpack.c.l.b16 %v33
    %v325 = vunpack.c.l.b16 %v34
    %v326 = vunpack.c.l.b16 %v35
    %v327 = vunpack.c.l.b16 %v36
    %v328 = vunpack.c.l.b16 %v37
    %v329 = vunpack.c.l.b16 %v38
    %v330 = vunpack.c.l.b16 %v39
    %v331 = vunpack.c.l.b16 %v40
    %v332 = vunpack.c.l.b16 %v41
    %v333 = vunpack.c.l.b16 %v42
    %v334 = vunpack.c.l.b16 %v43
    %v335 = vunpack.c.l.b16 %v44
    %v336 = vunpack.c.l.b16 %v45
    %v337 = vunpack.c.l.b16 %v46
    %v338 = vunpack.c.l.b16 %v47
    %v339 = vunpack.c.l.b16 %v48
    %v340 = vunpack.c.l.b16 %v49
    %v341 = vunpack.c.l.b16 %v50
    %v342 = vunpack.c.l.b16 %v51
    %v343 = vunpack.c.l.b16 %v52
    %v344 = vunpack.c.l.b16 %v53
    %v345 = vunpack.c.l.b16 %v54
    %v346 = vunpack.c.l.b16 %v55
    %v347 = vunpack.c.l.b16 %v56
    %v348 = vunpack.c.l.b16 %v57
    %v349 = vunpack.c.l.b16 %v58
    %v350 = vunpack.c.l.b16 %v59
    %v351 = vunpack.c.l.b16 %v60
    %v352 = vunpack.c.l.b16 %v61
    %v353 = vunpack.c.l.b16 %v62
    %v354 = vunpack.c.l.b16 %v63
    %v355 = vunpack.c.l.b16 %v64
    %v356 = vunpack.c.l.b16 %v65
    %v357 = vunpack.c.l.b16 %v66
    %v358 = vunpack.c.l.b16 %v67
    %v359 = vunpack.c.l.b16 %v68
    %v360 = vunpack.c.l.b16 %v69
    %v361 = vunpack.c.l.b16 %v70
    %v362 = vunpack.c.l.b16 %v71
    %v363 = vunpack.c.l.b16 %v72
    %v364 = vunpack.c.l.b16 %v73
    %v365 = vunpack.c.l.b16 %v74
    %v366 = vunpack.c.l.b16 %v75
    %v367 = vunpack.c.l.b16 %v76
    %v368 = vunpack.c.l.b16 %v77
    %v369 = vunpack.c.l.b16 %v78
    %v370 = vunpack.c.l.b16 %v79
    %v371 = vunpack.c.l.b16 %v80
    %v372 = vunpack.c.l.b16 %v81
    %v373 = vunpack.c.l.b16 %v82
    %v374 = vunpack.c.l.b16 %v83
    %v375 = vunpack.c.l.b16 %v84
    %v376 = vunpack.c.l.b16 %v85
    %v377 = vunpack.c.l.b16 %v86
    %v378 = vunpack.c.l.b16 %v87
    %v379 = vunpack.c.l.b16 %v88
    %v380 = vunpack.c.l.b16 %v89
    %v381 = vunpack.c.l.b16 %v90
    %v382 = vunpack.c.l.b16 %v91
    %v383 = vunpack.c.l.b16 %v92
    %v384 = vunpack.c.l.b16 %v93
    %v385 = vunpack.c.l.b16 %v94
    %v386 = vunpack.c.l.b16 %v95
    %v387 = vunpack.c.l.b16 %v96
    %v388 = vunpack.c.l.b16 %v97
    %v389 = vunpack.c.l.b16 %v98
    %v390 = vunpack.c.l.b16 %v99
    %v391 = vunpack.c.l.b16 %v100
    %v392 = vunpack.c.l.b16 %v101
    %v393 = vunpack.c.l.b16 %v102
    %v394 = vunpack.c.l.b16 %v103
    %v395 = vunpack.c.l.b16 %v104
    %v396 = vunpack.c.l.b16 %v105
    %v397 = vunpack.c.l.b16 %v106
    %v398 = vunpack.c.l.b16 %v107
    %v399 = vunpack.c.l.b16 %v108
    %v400 = vunpack.c.l.b16 %v109
    %v401 = vunpack.c.l.b16 %v110
    %v402 = vunpack.c.l.b16 %v111
    %v403 = vunpack.c.l.b16 %v112
    %v404 = vunpack.c.l.b16 %v113
    %v405 = vunpack.c.l.b16 %v114
    %v406 = vunpack.c.l.b16 %v115
    %v407 = vunpack.c.l.b16 %v116
    %v408 = vunpack.c.l.b16 %v117
    %v409 = vunpack.c.l.b16 %v118
    %v410 = vunpack.c.l.b16 %v119
    %v411 = vunpack.c.l.b16 %v120
    %v412 = vunpack.c.l.b16 %v121
    %v413 = vunpack.c.l.b16 %v122
    %v414 = vunpack.c.l.b16 %v123
    %v415 = vunpack.c.l.b16 %v124
    %v416 = vunpack.c.l.b16 %v125
    %v417 = vunpack.c.l.b16 %v126
    %v418 = vunpack.c.l.b16 %v127
    %v419 = vunpack.c.l.b16 %v128
    %v420 = vunpack.c.l.b16 %v129
    %v421 = vunpack.c.l.b16 %v130
    %v422 = vunpack.c.l.b16 %v131
    %v423 = vunpack.c.l.b16 %v132
    %v424 = vunpack.c.l.b16 %v133
    %v425 = vunpack.c.l.b16 %v134
    %v426 = vunpack.c.l.b16 %v135
    %v427 = vunpack.c.l.b16 %v136
    %v428 = vunpack.c.l.b16 %v137
    %v429 = vunpack.c.l.b16 %v138
    %v430 = vunpack.c.l.b16 %v139
    %v431 = vunpack.c.l.b16 %v140
    %v432 = vunpack.c.l.b16 %v141
    %v433 = vunpack.c.l.b16 %v142
    %v434 = vunpack.c.l.b16 %v143
    %v435 = vunpack.c.l.b16 %v144
    %v436 = vunpack.c.l.b16 %v145
    %v437 = vunpack.c.l.b16 %v146
    %v438 = vunpack.c.l.b16 %v147
    %v439 = vunpack.c.l.b16 %v148
    %v440 = vunpack.c.l.b16 %v149
    %v441 = vunpack.c.l.b16 %v150
    %v442 = vunpack.c.l.b16 %v151
    %v443 = vunpack.c.l.b16 %v152
    %v444 = vunpack.c.l.b16 %v153
    %v445 = vunpack.c.l.b16 %v154
    %v446 = vunpack.c.l.b16 %v155
    %v447 = vunpack.c.l.b16 %v156
    %v448 = vunpack.c.l.b16 %v157
    %v449 = vunpack.c.l.b16 %v158
    %v450 = vunpack.c.l.b16 %v159
    %v451 = vpack.c.b16 %v324, %v323
    %v452 = vpack.c.b16 %v326, %v325
    %v453 = vpack.c.b16 %v328, %v327
    %v454 = vpack.c.b16 %v330, %v329
    %v455 = vpack.c.b16 %v332, %v331
    %v456 = vpack.c.b16 %v334, %v333
    %v457 = vpack.c.b16 %v336, %v335
    %v458 = vpack.c.b16 %v338, %v337
    %v459 = vpack.c.b16 %v340, %v339
    %v460 = vpack.c.b16 %v342, %v341
    %v461 = vpack.c.b16 %v344, %v343
    %v462 = vpack.c.b16 %v346, %v345
    %v463 = vpack.c.b16 %v348, %v347
    %v464 = vpack.c.b16 %v350, %v349
    %v465 = vpack.c.b16 %v352, %v351
    %v466 = vpack.c.b16 %v354, %v353
    %v467 = vpack.c.b16 %v356, %v355
    %v468 = vpack.c.b16 %v358, %v357
    %v469 = vpack.c.b16 %v360, %v359
    %v470 = vpack.c.b16 %v362, %v361
    %v471 = vpack.c.b16 %v364, %v363
    %v472 = vpack.c.b16 %v366, %v365
    %v473 = vpack.c.b16 %v368, %v367
    %v474 = vpack.c.b16 %v370, %v369
    %v475 = vpack.c.b16 %v372, %v371
    %v476 = vpack.c.b16 %v374, %v373
    %v477 = vpack.c.b16 %v376, %v375
    %v478 = vpack.c.b16 %v378, %v377
    %v479 = vpack.c.b16 %v380, %v379
    %v480 = vpack.c.b16 %v382, %v381
    %v481 = vpack.c.b16 %v384, %v383
    %v482 = vpack.c.b16 %v386, %v385
    %v483 = vpack.c.b16 %v388, %v387
    %v484 = vpack.c.b16 %v390, %v389
    %v485 = vpack.c.b16 %v392, %v391
    %v486 = vpack.c.b16 %v394, %v393
    %v487 = vpack.c.b16 %v396, %v395
    %v488 = vpack.c.b16 %v398, %v397
    %v489 = vpack.c.b16 %v400, %v399
    %v490 = vpack.c.b16 %v402, %v401
    %v491 = vpack.c.b16 %v404, %v403
    %v492 = vpack.c.b16 %v406, %v405
    %v493 = vpack.c.b16 %v408, %v407
    %v494 = vpack.c.b16 %v410, %v409
    %v495 = vpack.c.b16 %v412, %v411
    %v496 = vpack.c.b16 %v414, %v413
    %v497 = vpack.c.b16 %v416, %v415
    %v498 = vpack.c.b16 %v418, %v417
    %v499 = vpack.c.b16 %v420, %v419
    %v500 = vpack.c.b16 %v422, %v421
    %v501 = vpack.c.b16 %v424, %v423
    %v502 = vpack.c.b16 %v426, %v425
    %v503 = vpack.c.b16 %v428, %v427
    %v504 = vpack.c.b16 %v430, %v429
    %v505 = vpack.c.b16 %v432, %v431
    %v506 = vpack.c.b16 %v434, %v433
    %v507 = vpack.c.b16 %v436, %v435
    %v508 = vpack.c.b16 %v438, %v437
    %v509 = vpack.c.b16 %v440, %v439
    %v510 = vpack.c.b16 %v442, %v441
    %v511 = vpack.c.b16 %v444, %v443
    %v512 = vpack.c.b16 %v446, %v445
    %v513 = vpack.c.b16 %v448, %v447
    %v514 = vpack.c.b16 %v450, %v449
    %579 = vmatprep.subr.bf16.mxu0 0
    %580 = vmatpush1.bf16.msra.mxu0 %v451
    %581 = vmatprep.subr.bf16.mxu0 0
    %582 = vmatpush1.bf16.msra.mxu0 %v452
    %583 = vmatprep.subr.bf16.mxu0 0
    %584 = vmatpush1.bf16.msra.mxu0 %v453
    %585 = vmatprep.subr.bf16.mxu0 0
    %586 = vmatpush1.bf16.msra.mxu0 %v454
    %587 = vmatprep.subr.bf16.mxu0 0
    %588 = vmatpush1.bf16.msra.mxu0 %v455
    %589 = vmatprep.subr.bf16.mxu0 0
    %590 = vmatpush1.bf16.msra.mxu0 %v456
    %591 = vmatprep.subr.bf16.mxu0 0
    %592 = vmatpush1.bf16.msra.mxu0 %v457
    %593 = vmatprep.subr.bf16.mxu0 0
    %594 = vmatpush1.bf16.msra.mxu0 %v458
    %595 = vmatprep.subr.bf16.mxu0 0
    %596 = vmatpush1.bf16.msra.mxu0 %v459
    %597 = vmatprep.subr.bf16.mxu0 0
    %598 = vmatpush1.bf16.msra.mxu0 %v460
    %599 = vmatprep.subr.bf16.mxu0 0
    %600 = vmatpush1.bf16.msra.mxu0 %v461
    %601 = vmatprep.subr.bf16.mxu0 0
    %602 = vmatpush1.bf16.msra.mxu0 %v462
    %603 = vmatprep.subr.bf16.mxu0 0
    %604 = vmatpush1.bf16.msra.mxu0 %v463
    %605 = vmatprep.subr.bf16.mxu0 0
    %606 = vmatpush1.bf16.msra.mxu0 %v464
    %607 = vmatprep.subr.bf16.mxu0 0
    %608 = vmatpush1.bf16.msra.mxu0 %v465
    %609 = vmatprep.subr.bf16.mxu0 0
    %610 = vmatpush1.bf16.msra.mxu0 %v466
    %611 = vmatprep.mubr.bf16.mxu0 %v180
    %612 = vmatmul.mubr.bf16.gmra.mrb[0].mxu0 %v179
    %v613 = vpop.f32.mrb[0].mxu0
    %v614 = vadd.f32 %v165, %v613
    %v615 = vpop.f32.mrb[0].mxu0
    %v616 = vpop.f32.mrb[0].mxu0
    %v617 = vpop.f32.mrb[0].mxu0
    %618 = vdwg.mxu0
    %619 = vmatprep.subr.bf16.mxu0 0
    %620 = vmatpush1.bf16.msra.mxu0 %v467
    %621 = vmatprep.subr.bf16.mxu0 0
    %622 = vmatpush1.bf16.msra.mxu0 %v468
    %623 = vmatprep.subr.bf16.mxu0 0
    %624 = vmatpush1.bf16.msra.mxu0 %v469
    %625 = vmatprep.subr.bf16.mxu0 0
    %626 = vmatpush1.bf16.msra.mxu0 %v470
    %627 = vmatprep.subr.bf16.mxu0 0
    %628 = vmatpush1.bf16.msra.mxu0 %v471
    %629 = vmatprep.subr.bf16.mxu0 0
    %630 = vmatpush1.bf16.msra.mxu0 %v472
    %631 = vmatprep.subr.bf16.mxu0 0
    %632 = vmatpush1.bf16.msra.mxu0 %v473
    %633 = vmatprep.subr.bf16.mxu0 0
    %634 = vmatpush1.bf16.msra.mxu0 %v474
    %635 = vmatprep.subr.bf16.mxu0 0
    %636 = vmatpush1.bf16.msra.mxu0 %v475
    %637 = vmatprep.subr.bf16.mxu0 0
    %638 = vmatpush1.bf16.msra.mxu0 %v476
    %639 = vmatprep.subr.bf16.mxu0 0
    %640 = vmatpush1.bf16.msra.mxu0 %v477
    %641 = vmatprep.subr.bf16.mxu0 0
    %642 = vmatpush1.bf16.msra.mxu0 %v478
    %643 = vmatprep.subr.bf16.mxu0 0
    %644 = vmatpush1.bf16.msra.mxu0 %v479
    %645 = vmatprep.subr.bf16.mxu0 0
    %646 = vmatpush1.bf16.msra.mxu0 %v480
    %647 = vmatprep.subr.bf16.mxu0 0
    %648 = vmatpush1.bf16.msra.mxu0 %v481
    %649 = vmatprep.subr.bf16.mxu0 0
    %650 = vmatpush1.bf16.msra.mxu0 %v482
    %651 = vmatprep.mubr.bf16.mxu0 %v182
    %652 = vmatmul.mubr.bf16.gmra.mrb[0].mxu0 %v181
    %v653 = vpop.f32.mrb[0].mxu0
    %v654 = vadd.f32 %v614, %v653
    %v655 = vpop.f32.mrb[0].mxu0
    %v656 = vpop.f32.mrb[0].mxu0
    %v657 = vpop.f32.mrb[0].mxu0
    %658 = vdwg.mxu0
    %659 = vmatprep.subr.bf16.mxu0 0
    %660 = vmatpush1.bf16.msra.mxu0 %v483
    %661 = vmatprep.subr.bf16.mxu0 0
    %662 = vmatpush1.bf16.msra.mxu0 %v484
    %663 = vmatprep.subr.bf16.mxu0 0
    %664 = vmatpush1.bf16.msra.mxu0 %v485
    %665 = vmatprep.subr.bf16.mxu0 0
    %666 = vmatpush1.bf16.msra.mxu0 %v486
    %667 = vmatprep.subr.bf16.mxu0 0
    %668 = vmatpush1.bf16.msra.mxu0 %v487
    %669 = vmatprep.subr.bf16.mxu0 0
    %670 = vmatpush1.bf16.msra.mxu0 %v488
    %671 = vmatprep.subr.bf16.mxu0 0
    %672 = vmatpush1.bf16.msra.mxu0 %v489
    %673 = vmatprep.subr.bf16.mxu0 0
    %674 = vmatpush1.bf16.msra.mxu0 %v490
    %675 = vmatprep.subr.bf16.mxu0 0
    %676 = vmatpush1.bf16.msra.mxu0 %v491
    %677 = vmatprep.subr.bf16.mxu0 0
    %678 = vmatpush1.bf16.msra.mxu0 %v492
    %679 = vmatprep.subr.bf16.mxu0 0
    %680 = vmatpush1.bf16.msra.mxu0 %v493
    %681 = vmatprep.subr.bf16.mxu0 0
    %682 = vmatpush1.bf16.msra.mxu0 %v494
    %683 = vmatprep.subr.bf16.mxu0 0
    %684 = vmatpush1.bf16.msra.mxu0 %v495
    %685 = vmatprep.subr.bf16.mxu0 0
    %686 = vmatpush1.bf16.msra.mxu0 %v496
    %687 = vmatprep.subr.bf16.mxu0 0
    %688 = vmatpush1.bf16.msra.mxu0 %v497
    %689 = vmatprep.subr.bf16.mxu0 0
    %690 = vmatpush1.bf16.msra.mxu0 %v498
    %691 = vmatprep.mubr.bf16.mxu0 %v184
    %692 = vmatmul.mubr.bf16.gmra.mrb[0].mxu0 %v183
    %v693 = vpop.f32.mrb[0].mxu0
    %v694 = vadd.f32 %v654, %v693
    %v695 = vpop.f32.mrb[0].mxu0
    %v696 = vpop.f32.mrb[0].mxu0
    %v697 = vpop.f32.mrb[0].mxu0
    %698 = vdwg.mxu0
    %699 = vmatprep.subr.bf16.mxu0 0
    %700 = vmatpush1.bf16.msra.mxu0 %v499
    %701 = vmatprep.subr.bf16.mxu0 0
    %702 = vmatpush1.bf16.msra.mxu0 %v500
    %703 = vmatprep.subr.bf16.mxu0 0
    %704 = vmatpush1.bf16.msra.mxu0 %v501
    %705 = vmatprep.subr.bf16.mxu0 0
    %706 = vmatpush1.bf16.msra.mxu0 %v502
    %707 = vmatprep.subr.bf16.mxu0 0
    %708 = vmatpush1.bf16.msra.mxu0 %v503
    %709 = vmatprep.subr.bf16.mxu0 0
    %710 = vmatpush1.bf16.msra.mxu0 %v504
    %711 = vmatprep.subr.bf16.mxu0 0
    %712 = vmatpush1.bf16.msra.mxu0 %v505
    %713 = vmatprep.subr.bf16.mxu0 0
    %714 = vmatpush1.bf16.msra.mxu0 %v506
    %715 = vmatprep.subr.bf16.mxu0 0
    %716 = vmatpush1.bf16.msra.mxu0 %v507
    %717 = vmatprep.subr.bf16.mxu0 0
    %718 = vmatpush1.bf16.msra.mxu0 %v508
    %719 = vmatprep.subr.bf16.mxu0 0
    %720 = vmatpush1.bf16.msra.mxu0 %v509
    %721 = vmatprep.subr.bf16.mxu0 0
    %722 = vmatpush1.bf16.msra.mxu0 %v510
    %723 = vmatprep.subr.bf16.mxu0 0
    %724 = vmatpush1.bf16.msra.mxu0 %v511
    %725 = vmatprep.subr.bf16.mxu0 0
    %726 = vmatpush1.bf16.msra.mxu0 %v512
    %727 = vmatprep.subr.bf16.mxu0 0
    %728 = vmatpush1.bf16.msra.mxu0 %v513
    %729 = vmatprep.subr.bf16.mxu0 0
    %730 = vmatpush1.bf16.msra.mxu0 %v514
    %731 = vmatprep.mubr.bf16.mxu0 %v186
    %732 = vmatmul.mubr.bf16.gmra.mrb[0].mxu0 %v185
    %v733 = vpop.f32.mrb[0].mxu0
    %v734 = vadd.f32 %v694, %v733
    %v735 = vpop.f32.mrb[0].mxu0
    %v736 = vpop.f32.mrb[0].mxu0
    %v737 = vpop.f32.mrb[0].mxu0
    %738 = vdwg.mxu0
    %v739 = vmul.f32 %v734, 0.5
    %v740 = vtanh.pop %v739
    %v741 = vmul.f32 %v740, 0.5
    %v742 = vadd.f32 %v741, 0.5
    %v743 = vpack.c.bf16 %v742, %v742
    %v744 = vld [vmem:[%s3] sm:$0xf]
    %v745 = vld [vmem:[%s3 + $0x4] sm:$0xf]
    %v746 = vld [vmem:[%s3 + $0x8] sm:$0xf]
    %v747 = vld [vmem:[%s3 + $0xc] sm:$0xf]
    %v748 = vld [vmem:[%s4] sm:$0x1]
    %v750 = vlaneseq
    %v751 = vshrl.u32 %v750, 7
    %v752 = vsub.s32 0, %v751
    %v753 = vrot.slane %v748, %v752
    %v759 = vunpack.c.l.b16 %v744
    %v760 = vunpack.c.l.b16 %v745
    %v761 = vunpack.c.l.b16 %v746
    %v762 = vunpack.c.l.b16 %v747
    %v763 = vpack.c.b16 %v760, %v759
    %v764 = vpack.c.b16 %v762, %v761
    %vm767 = vcmask 261120
    %v769 = vsel %vm767, %v743, 0
    %771 = vmatprep.subr.bf16.mxu0 0
    %772 = vmatpush1.bf16.msra.mxu0 %v763
    %773 = vmatprep.subr.bf16.mxu0 0
    %774 = vmatpush1.bf16.msra.mxu0 %v764
    %775 = vmatprep.subr.bf16.mxu0 0
    %776 = vmatpush1.bf16.msra.mxu0 0
    %777 = vmatprep.subr.bf16.mxu0 0
    %778 = vmatpush1.bf16.msra.mxu0 0
    %779 = vmatprep.subr.bf16.mxu0 0
    %780 = vmatpush1.bf16.msra.mxu0 0
    %781 = vmatprep.subr.bf16.mxu0 0
    %782 = vmatpush1.bf16.msra.mxu0 0
    %783 = vmatprep.subr.bf16.mxu0 0
    %784 = vmatpush1.bf16.msra.mxu0 0
    %785 = vmatprep.subr.bf16.mxu0 0
    %786 = vmatpush1.bf16.msra.mxu0 0
    %787 = vmatprep.subr.bf16.mxu0 0
    %788 = vmatpush1.bf16.msra.mxu0 0
    %789 = vmatprep.subr.bf16.mxu0 0
    %790 = vmatpush1.bf16.msra.mxu0 0
    %791 = vmatprep.subr.bf16.mxu0 0
    %792 = vmatpush1.bf16.msra.mxu0 0
    %793 = vmatprep.subr.bf16.mxu0 0
    %794 = vmatpush1.bf16.msra.mxu0 0
    %795 = vmatprep.subr.bf16.mxu0 0
    %796 = vmatpush1.bf16.msra.mxu0 0
    %797 = vmatprep.subr.bf16.mxu0 0
    %798 = vmatpush1.bf16.msra.mxu0 0
    %799 = vmatprep.subr.bf16.mxu0 0
    %800 = vmatpush1.bf16.msra.mxu0 0
    %801 = vmatprep.subr.bf16.mxu0 0
    %802 = vmatpush1.bf16.msra.mxu0 0
    %803 = vmatprep.mubr.bf16.mxu0 0
    %804 = vmatmul.mubr.bf16.gmra.mrb[0].mxu0 %v769
    %v805 = vpop.f32.mrb[0].mxu0
    %v806 = vadd.f32 %v753, %v805
    %v807 = vpop.f32.mrb[0].mxu0
    %v808 = vpop.f32.mrb[0].mxu0
    %v809 = vpop.f32.mrb[0].mxu0
    %810 = vdwg.mxu0
    %v811 = vmul.f32 %v806, 0.5
    %v812 = vtanh.pop %v811
    %v813 = vmul.f32 %v812, 0.5
    %v814 = vadd.f32 %v813, 0.5
    %v815 = vpack.c.bf16 %v814, %v814
    %v816 = vld [vmem:[%s5] sm:$0xf]
    %v817 = vld [vmem:[%s5 + $0x4] sm:$0xf]
    %v818 = vld [vmem:[%s5 + $0x8] sm:$0xf]
    %v819 = vld [vmem:[%s5 + $0xc] sm:$0xf]
    %v820 = vld [vmem:[%s6] sm:$0x1]
    %v822 = vlaneseq
    %v823 = vshrl.u32 %v822, 7
    %v824 = vsub.s32 0, %v823
    %v825 = vrot.slane %v820, %v824
    %v831 = vunpack.c.l.b16 %v816
    %v832 = vunpack.c.l.b16 %v817
    %v833 = vunpack.c.l.b16 %v818
    %v834 = vunpack.c.l.b16 %v819
    %v835 = vpack.c.b16 %v832, %v831
    %v836 = vpack.c.b16 %v834, %v833
    %v840 = vsel %vm767, %v815, 0
    %842 = vmatprep.subr.bf16.mxu0 0
    %843 = vmatpush1.bf16.msra.mxu0 %v835
    %844 = vmatprep.subr.bf16.mxu0 0
    %845 = vmatpush1.bf16.msra.mxu0 %v836
    %846 = vmatprep.subr.bf16.mxu0 0
    %847 = vmatpush1.bf16.msra.mxu0 0
    %848 = vmatprep.subr.bf16.mxu0 0
    %849 = vmatpush1.bf16.msra.mxu0 0
    %850 = vmatprep.subr.bf16.mxu0 0
    %851 = vmatpush1.bf16.msra.mxu0 0
    %852 = vmatprep.subr.bf16.mxu0 0
    %853 = vmatpush1.bf16.msra.mxu0 0
    %854 = vmatprep.subr.bf16.mxu0 0
    %855 = vmatpush1.bf16.msra.mxu0 0
    %856 = vmatprep.subr.bf16.mxu0 0
    %857 = vmatpush1.bf16.msra.mxu0 0
    %858 = vmatprep.subr.bf16.mxu0 0
    %859 = vmatpush1.bf16.msra.mxu0 0
    %860 = vmatprep.subr.bf16.mxu0 0
    %861 = vmatpush1.bf16.msra.mxu0 0
    %862 = vmatprep.subr.bf16.mxu0 0
    %863 = vmatpush1.bf16.msra.mxu0 0
    %864 = vmatprep.subr.bf16.mxu0 0
    %865 = vmatpush1.bf16.msra.mxu0 0
    %866 = vmatprep.subr.bf16.mxu0 0
    %867 = vmatpush1.bf16.msra.mxu0 0
    %868 = vmatprep.subr.bf16.mxu0 0
    %869 = vmatpush1.bf16.msra.mxu0 0
    %870 = vmatprep.subr.bf16.mxu0 0
    %871 = vmatpush1.bf16.msra.mxu0 0
    %872 = vmatprep.subr.bf16.mxu0 0
    %873 = vmatpush1.bf16.msra.mxu0 0
    %874 = vmatprep.mubr.bf16.mxu0 0
    %875 = vmatmul.mubr.bf16.gmra.mrb[0].mxu0 %v840
    %v876 = vpop.f32.mrb[0].mxu0
    %v877 = vadd.f32 %v825, %v876
    %v878 = vpop.f32.mrb[0].mxu0
    %v879 = vpop.f32.mrb[0].mxu0
    %v880 = vpop.f32.mrb[0].mxu0
    %881 = vdwg.mxu0
    %882 = vst [vmem:[#allocation2] sm:$0xff] %v877
    // Predicated region
    $region30: #{tpu_custom_call.1} parent=1 // pred_check
      _
    $region31: #{tpu_custom_call.1} parent=1 // pred_check_branch
      %884 = sbr.rel (0) target = $region33
    $region32: #{tpu_custom_call.1} parent=1 // pred_region
      %s886 = ssub.s32 128, 128
      %887 = vsyncadd [#allocation3], %s886
      %s889 = sshll.u32 [#allocation2], 4
      %s890 = int_to_ptr.vmem [resolvable:$true] %s889
      %892 = dma.vmem_to_hbm [thread:$0]  %s890, 128, %s7, [#allocation3]
    $region33: #{tpu_custom_call.1} parent=1 // pred_fallthru
      _
    // Predicated region
    $region34: #{tpu_custom_call.1} parent=1 // pred_check
      _
    $region35: #{tpu_custom_call.1} parent=1 // pred_check_branch
      %894 = sbr.rel (0) target = $region37
    $region36: #{tpu_custom_call.1} parent=1 // pred_region
      %895 = dma.done [#allocation3], 128
    $region37: #{tpu_custom_call.1} parent=1 // pred_fallthru
      _
    %896 = vsyncpa [#allocation3], 1

</llo_original>
